<compile_context>
chip_gen: v6e
topology: v6e:2x2x1
jax: 0.10.0
libtpu: 0.0.40
codegen_flags: <defaults>
</compile_context>

<pallas_src>
import functools

import numpy as np
import jax
import jax.numpy as jnp
from jax.experimental import pallas as pl
from jax.experimental.pallas import tpu as pltpu

LANES = 128
NUM_SPLITS = 2   # leading "parallel" grid axis for the observer: shards the row
                 # range across both TensorCores on multi-TC chips (v7x/megacore);
                 # runs serially (negligible overhead) on 1-TC chips (v5e/v6e).


def _row_align(dtype):
    """Minimum sublane tile: 8 rows for 4-byte, 16 for 2-byte, 32 for 1-byte."""
    return max(8, 32 // max(1, np.dtype(dtype).itemsize))


@functools.lru_cache(maxsize=None)
def _block_config():
    """(per-block byte budget, vmem_limit_bytes), derived from physical VMEM."""
    try:
        cap = int(pltpu.get_tpu_info().vmem_capacity_bytes)
    except Exception:
        cap = 128 * 1024 * 1024
    # ~4 MiB blocks on 128 MiB-VMEM parts (v5e/v6e); ~3 MiB on 64 MiB parts (v7x).
    block_bytes = (4 if cap >= 96 * 1024 * 1024 else 3) * 1024 * 1024
    # fake-quant holds in+out double-buffered = 4x block; leave headroom above
    # that while staying far below physical VMEM on every generation.
    vmem_limit = 6 * block_bytes + (8 << 20)
    return block_bytes, vmem_limit


# ---------------------------------------------------------------------------
# slab packing helpers (glue, plain JAX; runs inside the jitted entry points)
# ---------------------------------------------------------------------------
def _slab_layout(n, dtype):
    align = _row_align(dtype)
    block_bytes, _ = _block_config()
    budget_rows = max(
        align,
        (block_bytes // (LANES * np.dtype(dtype).itemsize)) // align * align)
    rows = -(-n // LANES)
    rows_p = -(-rows // align) * align
    block_rows = min(budget_rows, rows_p)
    total_steps = -(-rows_p // block_rows)   # last block may be partial (masked)
    pad = rows_p * LANES - n
    return rows_p, block_rows, total_steps, pad


def _to_slab(x):
    """Flatten to a lane-dense (rows, 128) slab in the native dtype."""
    flat = jnp.ravel(x)
    n = flat.shape[0]
    rows_p, block_rows, total_steps, pad = _slab_layout(n, x.dtype)
    if pad:
        # TODO(synk): the host-side pad here (and the matching [:n] slice on the
        # fake-quant output) costs an extra HBM pass for lane-unaligned numel;
        # the lane-aligned common case reshapes for free.
        flat = jnp.pad(flat, (0, pad))
    return flat.reshape(rows_p, LANES), n, block_rows, total_steps


# ---------------------------------------------------------------------------
# Kernel 1: per-array observer statistics (MinMaxMeanVarObserver.update)
# ---------------------------------------------------------------------------
def _stats_kernel(x_ref, min_ref, max_ref, sum_ref, ssq_ref, *,
                  n_valid, acc_rows, total_steps, steps_per_split,
                  has_tail, needs_guard, tail_base, tail_prefix_rows,
                  tail_masked_rows):
    c = pl.program_id(0)                 # TensorCore split ("parallel")
    i = pl.program_id(1)                 # row-block step within split ("arbitrary")
    b = c * steps_per_split + i          # global (unclamped) row-block index

    @pl.when(i == 0)
    def _():
        min_ref[...] = jnp.full_like(min_ref, jnp.inf)
        max_ref[...] = jnp.full_like(max_ref, -jnp.inf)
        sum_ref[...] = jnp.zeros_like(sum_ref)
        ssq_ref[...] = jnp.zeros_like(ssq_ref)

    x = x_ref[...]                       # native dtype (min/max stay native)
    block_rows = x.shape[0]

    def accumulate(x_min, x_max, x_sum_f32, rows):
        # Pure elementwise (VPU) folds into (acc_rows,128) resident output
        # blocks; no cross-lane XLU reductions / scalar stores in the hot loop.
        g = rows // acc_rows
        min_ref[...] = jnp.minimum(
            min_ref[...], jnp.min(x_min.reshape(g, acc_rows, LANES), axis=0))
        max_ref[...] = jnp.maximum(
            max_ref[...], jnp.max(x_max.reshape(g, acc_rows, LANES), axis=0))
        xs = x_sum_f32.reshape(g, acc_rows, LANES)
        sum_ref[...] = sum_ref[...] + jnp.sum(xs, axis=0)
        ssq_ref[...] = ssq_ref[...] + jnp.sum(xs * xs, axis=0)

    if has_tail:
        last = total_steps - 1

        @pl.when(b < last)
        def _():
            accumulate(x, x, x.astype(jnp.float32), block_rows)

        @pl.when(b == last)
        def _():
            # Statically determined fully-valid prefix + (at most one sublane
            # tile of) masked boundary rows; rows beyond them (host / Pallas
            # padding) are skipped.  Duplicated clamped steps have b > last.
            if tail_prefix_rows:
                xp = x[:tail_prefix_rows]
                accumulate(xp, xp, xp.astype(jnp.float32), tail_prefix_rows)
            if tail_masked_rows:
                lo_row = tail_prefix_rows
                xr = x[lo_row:lo_row + tail_masked_rows]
                xrf = xr.astype(jnp.float32)
                start = tail_base + lo_row * LANES
                ridx = jax.lax.broadcasted_iota(
                    jnp.int32, (tail_masked_rows, LANES), 0)
                lidx = jax.lax.broadcasted_iota(
                    jnp.int32, (tail_masked_rows, LANES), 1)
                valid = (start + ridx * LANES + lidx) < n_valid
                pos = jnp.array(jnp.inf, dtype=x.dtype)
                neg = jnp.array(-jnp.inf, dtype=x.dtype)
                accumulate(jnp.where(valid, xr, pos),
                           jnp.where(valid, xr, neg),
                           jnp.where(valid, xrf, jnp.float32(0.0)),
                           tail_masked_rows)
    elif needs_guard:
        @pl.when(b < total_steps)
        def _():
            accumulate(x, x, x.astype(jnp.float32), block_rows)
    else:
        accumulate(x, x, x.astype(jnp.float32), block_rows)


def _observe_impl(x):
    """Per-array min / max / mean / var of x (MinMaxMeanVarObserver.update)."""
    if not jnp.issubdtype(x.dtype, jnp.floating):
        x = x.astype(jnp.float32)
    slab, n, block_rows, total_steps = _to_slab(x)
    acc_rows = _row_align(slab.dtype)
    steps_per_split = -(-total_steps // NUM_SPLITS)
    has_tail = (total_steps * block_rows * LANES) != n
    needs_guard = (NUM_SPLITS * steps_per_split) != total_steps
    _, vmem_limit = _block_config()

    # Static tail geometry: fully-valid prefix rows (tile-aligned) plus at most
    # one sublane tile of masked boundary rows inside the last block.
    tail_base = (total_steps - 1) * block_rows * LANES
    tail_valid = n - tail_base
    vr_full = tail_valid // LANES
    vr_any = -(-tail_valid // LANES)
    tail_prefix_rows = (vr_full // acc_rows) * acc_rows
    tail_masked_rows = acc_rows if vr_any > tail_prefix_rows else 0

    kernel = functools.partial(
        _stats_kernel, n_valid=n, acc_rows=acc_rows, total_steps=total_steps,
        steps_per_split=steps_per_split, has_tail=has_tail,
        needs_guard=needs_guard, tail_base=tail_base,
        tail_prefix_rows=tail_prefix_rows, tail_masked_rows=tail_masked_rows)

    def x_map(c, i):
        # Clamp the (at most one) overhanging step of the 2-way split onto the
        # last real block; the kernel skips its accumulation.
        return (jnp.minimum(c * steps_per_split + i, total_steps - 1), 0)

    acc_spec = pl.BlockSpec((acc_rows, LANES), lambda c, i: (c, 0))
    native_acc = jax.ShapeDtypeStruct((NUM_SPLITS * acc_rows, LANES), slab.dtype)
    f32_acc = jax.ShapeDtypeStruct((NUM_SPLITS * acc_rows, LANES), jnp.float32)

    mn_o, mx_o, sm_o, sq_o = pl.pallas_call(
        kernel,
        out_shape=(native_acc, native_acc, f32_acc, f32_acc),
        grid_spec=pltpu.PrefetchScalarGridSpec(
            num_scalar_prefetch=0,
            grid=(NUM_SPLITS, steps_per_split),
            in_specs=[pl.BlockSpec((block_rows, LANES), x_map)],
            out_specs=[acc_spec, acc_spec, acc_spec, acc_spec],
        ),
        compiler_params=pltpu.CompilerParams(
            dimension_semantics=("parallel", "arbitrary"),
            vmem_limit_bytes=vmem_limit),
    )(slab)

    # Tiny cross-lane / cross-core epilogue; fused into this jitted dispatch.
    mn = jnp.min(mn_o).astype(jnp.float32)
    mx = jnp.max(mx_o).astype(jnp.float32)
    mean = jnp.sum(sm_o) / n
    # TODO(synk): E[x^2]-E[x]^2 in f32 can cancel for large-mean tensors
    # (acceptable for observer range estimation).
    var = jnp.sum(sq_o) / n - mean * mean
    return mn, mx, mean, var


observe = jax.jit(_observe_impl)


# ---------------------------------------------------------------------------
# Kernel 2: uniform fake-quantisation (the _call_qop hot path)
# ---------------------------------------------------------------------------
def _fq_kernel(q_ref, x_ref, o_ref):
    # q_ref (SMEM, f32[4]) = [clip_lo, clip_hi, eps, 1/eps]; passing them as
    # SMEM scalars (not baked constants) avoids a Mosaic recompile on every
    # scale / zero-point update during QAT / re-calibration.
    lo, hi, eps, inv_eps = q_ref[0], q_ref[1], q_ref[2], q_ref[3]
    x = x_ref[...].astype(jnp.float32)
    o_ref[...] = (jnp.round(jnp.clip(x, lo, hi) * inv_eps) * eps).astype(o_ref.dtype)


def _fake_quantize_impl(x, qparams):
    """Elementwise per-array uniform fake quantisation (native dtype in/out)."""
    orig_shape = x.shape
    slab, n, block_rows, total_steps = _to_slab(x)
    _, vmem_limit = _block_config()

    data_spec = pl.BlockSpec((block_rows, LANES), lambda i: (i, 0))
    out = pl.pallas_call(
        _fq_kernel,
        out_shape=jax.ShapeDtypeStruct(slab.shape, x.dtype),
        grid_spec=pltpu.PrefetchScalarGridSpec(
            num_scalar_prefetch=0,
            grid=(total_steps,),
            in_specs=[pl.BlockSpec(memory_space=pltpu.MemorySpace.SMEM),
                      data_spec],
            out_specs=data_spec,
        ),
        compiler_params=pltpu.CompilerParams(
            dimension_semantics=("parallel",),
            vmem_limit_bytes=vmem_limit),
    )(qparams, slab)

    flat = jnp.ravel(out)
    if flat.shape[0] != n:
        flat = flat[:n]
    return flat.reshape(orig_shape)


fake_quantize = jax.jit(_fake_quantize_impl)


# ---------------------------------------------------------------------------
# _QActivation module emulation (parameter bookkeeping is plain-Python glue)
# ---------------------------------------------------------------------------
class QActivation:
    """Per-array fake-quantised activation (quantlib _QActivation forward)."""

    def __init__(self, n_levels=256, step=1.0):
        self.n_levels = float(n_levels)
        self.step = float(step)
        self.zero = 0.0       # placeholder until init_qhparams (stop_observing)
        self.scale = 1.0      # placeholder until init_qhparams (stop_observing)
        self.is_observing = False
        self.is_quantised = False
        self._stats = None
        self._set_clipping_bounds()

    def _set_clipping_bounds(self):
        eps = self.scale * self.step
        self.clip_lo = eps * self.zero
        self.clip_hi = eps * (self.zero + self.n_levels - 1.0)
        # Device-resident quantiser scalars: updated only when hyper-parameters
        # change, read by the fake-quant kernel from SMEM (no recompiles).
        self._qparams = jnp.asarray(
            [self.clip_lo, self.clip_hi, eps, 1.0 / eps], dtype=jnp.float32)

    def start_observing(self):
        self.is_observing = True
        self._stats = None

    def stop_observing(self):
        # minmax init strategy, offset not pinned (quantlib get_zero_scale)
        self.is_observing = False
        a, b, _, _ = self._stats
        a = float(a)
        b = float(b)
        scale = max(b - a, 1e-12) / (self.step * (self.n_levels - 1.0))
        zero = round(a / (scale * self.step))
        self.scale = scale
        self.zero = float(zero)
        self._set_clipping_bounds()
        self.is_quantised = True

    def __call__(self, x):
        # TODO(synk): if observing and quantised are ever simultaneously true
        # (QAT re-calibration), a fused stats+fake-quant kernel would save one
        # full HBM read of x; kept separate since PTQ phases never overlap.
        if self.is_observing:
            self._stats = observe(x)                 # Pallas reduction kernel
        if self.is_quantised:
            return fake_quantize(x, self._qparams)   # Pallas streaming kernel
        return x                                     # FP passthrough (identity)


# ---------------------------------------------------------------------------
if __name__ == "__main__":
    key = jax.random.PRNGKey(0)
    x = jax.random.normal(key, (2, 4, 16, 16), dtype=jnp.float32)  # NCHW activation

    qact = QActivation(n_levels=256, step=1.0)

    # Phase 1: observing, not yet quantised -> identity output + stat collection.
    qact.start_observing()
    y_fp = jax.block_until_ready(qact(x))
    assert jnp.allclose(y_fp, x), "FP passthrough mismatch"

    mn, mx, mean, var = [jax.block_until_ready(v) for v in qact._stats]
    assert jnp.allclose(mn, jnp.min(x), rtol=1e-6, atol=1e-6)
    assert jnp.allclose(mx, jnp.max(x), rtol=1e-6, atol=1e-6)
    assert jnp.allclose(mean, jnp.mean(x), rtol=1e-5, atol=1e-5)
    assert jnp.allclose(var, jnp.var(x), rtol=1e-4, atol=1e-5)

    # Phase 2: stop observing -> hyper-params initialised -> quantised forward.
    qact.stop_observing()
    y_q = jax.block_until_ready(qact(x))
    eps = qact.scale * qact.step
    ref = jnp.round(jnp.clip(x, qact.clip_lo, qact.clip_hi) * (1.0 / eps)) * eps
    assert jnp.allclose(y_q, ref, rtol=1e-5, atol=1e-5), "fake-quant mismatch"

    # Extra coverage: multi-block grid, ragged last block, 2-way core split with
    # one clamped/duplicated step.
    x2 = jax.random.normal(jax.random.PRNGKey(1), (4, 64, 96, 97), jnp.float32)
    mn2, mx2, mean2, var2 = observe(x2)
    assert jnp.allclose(mn2, jnp.min(x2), rtol=1e-6, atol=1e-6)
    assert jnp.allclose(mx2, jnp.max(x2), rtol=1e-6, atol=1e-6)
    assert jnp.allclose(mean2, jnp.mean(x2), rtol=1e-3, atol=2e-4)
    assert jnp.allclose(var2, jnp.var(x2), rtol=1e-3, atol=1e-3)
    y2 = jax.block_until_ready(fake_quantize(x2, qact._qparams))
    ref2 = jnp.round(jnp.clip(x2, qact.clip_lo, qact.clip_hi) * (1.0 / eps)) * eps
    assert jnp.allclose(y2, ref2, rtol=1e-5, atol=1e-5), "tiled fake-quant mismatch"

    # Extra coverage: lane-unaligned numel (host pad + in-kernel tail mask).
    x3 = jax.random.normal(jax.random.PRNGKey(2), (3, 5, 7), jnp.float32)
    mn3, mx3, mean3, var3 = observe(x3)
    assert jnp.allclose(mn3, jnp.min(x3), rtol=1e-6, atol=1e-6)
    assert jnp.allclose(mx3, jnp.max(x3), rtol=1e-6, atol=1e-6)
    assert jnp.allclose(mean3, jnp.mean(x3), rtol=1e-5, atol=1e-5)
    assert jnp.allclose(var3, jnp.var(x3), rtol=1e-4, atol=1e-4)
    y3 = jax.block_until_ready(fake_quantize(x3, qact._qparams))
    ref3 = jnp.round(jnp.clip(x3, qact.clip_lo, qact.clip_hi) * (1.0 / eps)) * eps
    assert jnp.allclose(y3, ref3, rtol=1e-5, atol=1e-5), "ragged fake-quant mismatch"

    # Extra coverage: bf16 activations (native-dtype min/max, 16-row sublane tile).
    x4 = jax.random.normal(jax.random.PRNGKey(3), (2, 8, 128, 128)).astype(jnp.bfloat16)
    mn4, mx4, mean4, var4 = observe(x4)
    x4f = x4.astype(jnp.float32)
    assert jnp.allclose(mn4, jnp.min(x4f), rtol=0, atol=1e-6)
    assert jnp.allclose(mx4, jnp.max(x4f), rtol=0, atol=1e-6)
    assert jnp.allclose(mean4, jnp.mean(x4f), rtol=1e-2, atol=1e-3)
    assert jnp.allclose(var4, jnp.var(x4f), rtol=1e-2, atol=1e-3)
    y4 = jax.block_until_ready(fake_quantize(x4, qact._qparams))
    ref4 = (jnp.round(jnp.clip(x4f, qact.clip_lo, qact.clip_hi) * (1.0 / eps))
            * eps).astype(jnp.bfloat16)
    assert jnp.allclose(y4.astype(jnp.float32), ref4.astype(jnp.float32),
                        rtol=0, atol=1e-2), "bf16 fake-quant mismatch"

    print("KERNEL_OK")
</pallas_src>

<mosaic_0001>
module attributes {stable_mosaic.version = 11 : i64} {
  func.func @_stats_kernel(%arg0: i32, %arg1: i32, %arg2: memref<16x128xf32, #tpu.memory_space<vmem>>, %arg3: memref<8x128xf32, #tpu.memory_space<vmem>>, %arg4: memref<8x128xf32, #tpu.memory_space<vmem>>, %arg5: memref<8x128xf32, #tpu.memory_space<vmem>>, %arg6: memref<8x128xf32, #tpu.memory_space<vmem>>) attributes {dimension_semantics = [#tpu.dimension_semantics<parallel>, #tpu.dimension_semantics<arbitrary>], iteration_bounds = array<i64: 2, 1>, scalar_prefetch = 0 : i64, scratch_operands = 0 : i64, tpu.core_type = #tpu.core_type<tc>, window_params = [{transform_indices = @transform_0, window_bounds = array<i64: 16, 128>}, {transform_indices = @transform_1, window_bounds = array<i64: 8, 128>}, {transform_indices = @transform_2, window_bounds = array<i64: 8, 128>}, {transform_indices = @transform_3, window_bounds = array<i64: 8, 128>}, {transform_indices = @transform_4, window_bounds = array<i64: 8, 128>}]} {
    %c1_i32 = arith.constant 1 : i32
    %0 = arith.muli %arg0, %c1_i32 : i32
    %1 = arith.addi %0, %arg1 : i32
    %c0_i32 = arith.constant 0 : i32
    %2 = arith.cmpi eq, %arg1, %c0_i32 : i32
    %3 = arith.extui %2 : i1 to i32
    %c0_i32_0 = arith.constant 0 : i32
    %4 = arith.cmpi ne, %3, %c0_i32_0 : i32
    scf.if %4 {
      %cst = arith.constant 0x7F800000 : f32
      %9 = vector.broadcast %cst : f32 to vector<8x128xf32>
      %c0_4 = arith.constant 0 : index
      %c0_5 = arith.constant 0 : index
      %10 = vector.load %arg3[%c0_4, %c0_5] : memref<8x128xf32, #tpu.memory_space<vmem>>, vector<8x128xf32>
      tpu.vector_store %arg3[%c0_4, %c0_5], %9 {strides = array<i32>} : memref<8x128xf32, #tpu.memory_space<vmem>>, vector<8x128xf32>,
      %cst_6 = arith.constant 0xFF800000 : f32
      %11 = vector.broadcast %cst_6 : f32 to vector<8x128xf32>
      %c0_7 = arith.constant 0 : index
      %c0_8 = arith.constant 0 : index
      %12 = vector.load %arg4[%c0_7, %c0_8] : memref<8x128xf32, #tpu.memory_space<vmem>>, vector<8x128xf32>
      tpu.vector_store %arg4[%c0_7, %c0_8], %11 {strides = array<i32>} : memref<8x128xf32, #tpu.memory_space<vmem>>, vector<8x128xf32>,
      %cst_9 = arith.constant 0.000000e+00 : f32
      %13 = vector.broadcast %cst_9 : f32 to vector<8x128xf32>
      %c0_10 = arith.constant 0 : index
      %c0_11 = arith.constant 0 : index
      %14 = vector.load %arg5[%c0_10, %c0_11] : memref<8x128xf32, #tpu.memory_space<vmem>>, vector<8x128xf32>
      tpu.vector_store %arg5[%c0_10, %c0_11], %13 {strides = array<i32>} : memref<8x128xf32, #tpu.memory_space<vmem>>, vector<8x128xf32>,
      %cst_12 = arith.constant 0.000000e+00 : f32
      %15 = vector.broadcast %cst_12 : f32 to vector<8x128xf32>
      %c0_13 = arith.constant 0 : index
      %c0_14 = arith.constant 0 : index
      %16 = vector.load %arg6[%c0_13, %c0_14] : memref<8x128xf32, #tpu.memory_space<vmem>>, vector<8x128xf32>
      tpu.vector_store %arg6[%c0_13, %c0_14], %15 {strides = array<i32>} : memref<8x128xf32, #tpu.memory_space<vmem>>, vector<8x128xf32>,
    } else {
    }
    %c0 = arith.constant 0 : index
    %c0_1 = arith.constant 0 : index
    %5 = vector.load %arg2[%c0, %c0_1] : memref<16x128xf32, #tpu.memory_space<vmem>>, vector<16x128xf32>
    %c1_i32_2 = arith.constant 1 : i32
    %6 = arith.cmpi slt, %1, %c1_i32_2 : i32
    %7 = arith.extui %6 : i1 to i32
    %c0_i32_3 = arith.constant 0 : i32
    %8 = arith.cmpi ne, %7, %c0_i32_3 : i32
    scf.if %8 {
      %c0_4 = arith.constant 0 : index
      %c0_5 = arith.constant 0 : index
      %9 = vector.load %arg3[%c0_4, %c0_5] : memref<8x128xf32, #tpu.memory_space<vmem>>, vector<8x128xf32>
      %10 = vector.shape_cast %5 : vector<16x128xf32> to vector<2x8x128xf32>
      %cst = arith.constant dense<0x7F800000> : vector<8x128xf32>
      %11 = vector.multi_reduction <minimumf>, %10, %cst [0] : vector<2x8x128xf32> to vector<8x128xf32>
      %12 = arith.minimumf %9, %11 : vector<8x128xf32>
      %c0_6 = arith.constant 0 : index
      %c0_7 = arith.constant 0 : index
      %13 = vector.load %arg3[%c0_6, %c0_7] : memref<8x128xf32, #tpu.memory_space<vmem>>, vector<8x128xf32>
      tpu.vector_store %arg3[%c0_6, %c0_7], %12 {strides = array<i32>} : memref<8x128xf32, #tpu.memory_space<vmem>>, vector<8x128xf32>,
      %c0_8 = arith.constant 0 : index
      %c0_9 = arith.constant 0 : index
      %14 = vector.load %arg4[%c0_8, %c0_9] : memref<8x128xf32, #tpu.memory_space<vmem>>, vector<8x128xf32>
      %15 = vector.shape_cast %5 : vector<16x128xf32> to vector<2x8x128xf32>
      %cst_10 = arith.constant dense<0xFF800000> : vector<8x128xf32>
      %16 = vector.multi_reduction <maximumf>, %15, %cst_10 [0] : vector<2x8x128xf32> to vector<8x128xf32>
      %17 = arith.maximumf %14, %16 : vector<8x128xf32>
      %c0_11 = arith.constant 0 : index
      %c0_12 = arith.constant 0 : index
      %18 = vector.load %arg4[%c0_11, %c0_12] : memref<8x128xf32, #tpu.memory_space<vmem>>, vector<8x128xf32>
      tpu.vector_store %arg4[%c0_11, %c0_12], %17 {strides = array<i32>} : memref<8x128xf32, #tpu.memory_space<vmem>>, vector<8x128xf32>,
      %19 = vector.shape_cast %5 : vector<16x128xf32> to vector<2x8x128xf32>
      %c0_13 = arith.constant 0 : index
      %c0_14 = arith.constant 0 : index
      %20 = vector.load %arg5[%c0_13, %c0_14] : memref<8x128xf32, #tpu.memory_space<vmem>>, vector<8x128xf32>
      %cst_15 = arith.constant dense<0.000000e+00> : vector<8x128xf32>
      %21 = vector.multi_reduction <add>, %19, %cst_15 [0] : vector<2x8x128xf32> to vector<8x128xf32>
      %22 = arith.addf %20, %21 : vector<8x128xf32>
      %c0_16 = arith.constant 0 : index
      %c0_17 = arith.constant 0 : index
      %23 = vector.load %arg5[%c0_16, %c0_17] : memref<8x128xf32, #tpu.memory_space<vmem>>, vector<8x128xf32>
      tpu.vector_store %arg5[%c0_16, %c0_17], %22 {strides = array<i32>} : memref<8x128xf32, #tpu.memory_space<vmem>>, vector<8x128xf32>,
      %c0_18 = arith.constant 0 : index
      %c0_19 = arith.constant 0 : index
      %24 = vector.load %arg6[%c0_18, %c0_19] : memref<8x128xf32, #tpu.memory_space<vmem>>, vector<8x128xf32>
      %25 = arith.mulf %19, %19 : vector<2x8x128xf32>
      %cst_20 = arith.constant dense<0.000000e+00> : vector<8x128xf32>
      %26 = vector.multi_reduction <add>, %25, %cst_20 [0] : vector<2x8x128xf32> to vector<8x128xf32>
      %27 = arith.addf %24, %26 : vector<8x128xf32>
      %c0_21 = arith.constant 0 : index
      %c0_22 = arith.constant 0 : index
      %28 = vector.load %arg6[%c0_21, %c0_22] : memref<8x128xf32, #tpu.memory_space<vmem>>, vector<8x128xf32>
      tpu.vector_store %arg6[%c0_21, %c0_22], %27 {strides = array<i32>} : memref<8x128xf32, #tpu.memory_space<vmem>>, vector<8x128xf32>,
    } else {
    }
    return
  }
  func.func @transform_0(%arg0: i32, %arg1: i32) -> (i32, i32) {
    %c1_i32 = arith.constant 1 : i32
    %0 = arith.muli %arg0, %c1_i32 : i32
    %1 = arith.addi %0, %arg1 : i32
    %c0_i32 = arith.constant 0 : i32
    %2 = arith.minsi %1, %c0_i32 : i32
    %c0_i32_0 = arith.constant 0 : i32
    %c0_i32_1 = arith.constant 0 : i32
    return %2, %c0_i32_0 : i32, i32
  }
  func.func @transform_1(%arg0: i32, %arg1: i32) -> (i32, i32) {
    %c0_i32 = arith.constant 0 : i32
    %c0_i32_0 = arith.constant 0 : i32
    return %arg0, %c0_i32 : i32, i32
  }
  func.func @transform_2(%arg0: i32, %arg1: i32) -> (i32, i32) {
    %c0_i32 = arith.constant 0 : i32
    %c0_i32_0 = arith.constant 0 : i32
    return %arg0, %c0_i32 : i32, i32
  }
  func.func @transform_3(%arg0: i32, %arg1: i32) -> (i32, i32) {
    %c0_i32 = arith.constant 0 : i32
    %c0_i32_0 = arith.constant 0 : i32
    return %arg0, %c0_i32 : i32, i32
  }
  func.func @transform_4(%arg0: i32, %arg1: i32) -> (i32, i32) {
    %c0_i32 = arith.constant 0 : i32
    %c0_i32_0 = arith.constant 0 : i32
    return %arg0, %c0_i32 : i32, i32
  }
}

</mosaic_0001>

<llo_original>
// kernel: _observe_impl.1
$region0: #{_observe_impl.1}
  #allocation0 [shape = 'u32[]', space=smem, size = 0x4, offset = 0x4, fixed_abs, tag = 'smem constant byte address 0x4 - core index']
  #allocation1 [shape = 'u32[144,128]{1,0:T(1,128)}', space=vmem, size = 0x12000, scoped, tag = 'internal scratch']
  %s0 = inlined_call_operand.vmem [shape: f32[16,128], index: 0, kind: input, shape index: {}]
  %s1 = inlined_call_operand.vmem [shape: f32[16,128], index: 1, kind: output, shape index: {0}]
  %s2 = inlined_call_operand.vmem [shape: f32[16,128], index: 2, kind: output, shape index: {1}]
  %s3 = inlined_call_operand.vmem [shape: f32[16,128], index: 3, kind: output, shape index: {2}]
  %s4 = inlined_call_operand.vmem [shape: f32[16,128], index: 4, kind: output, shape index: {3}]
  %5 = xla_tuple %s1, %s2, %s3, %s4
  %s6 = sld [smem:[#allocation0]]
  $region69: #{_observe_impl.1} parent=0
    _
  %s8 = ssub.s32 1, %s6
  %s9 = scalar_select 0, %s8, %s6
  loop: start=0, step=1, limit=4
  $region2: #{_observe_impl.1} parent=0 // loop_pre_header
    _
  $region3: #{_observe_impl.1} parent=0 // loop_header
    %s11 = sphi 0, %s15
    %p12 = scmp.ge.s32.totalorder %s11, 4
    %s18 = sphi 0, %s30
    %s19 = sphi 0, %s26
    %s20 = sphi 0, %s18
    %s21 = sphi 0, %s19
    %s22 = sphi 0, %s20
    %s23 = sphi 0, %s21
    %s39 = sphi 0, %s41
    %s42 = sphi 0, %s39
    %s43 = sphi 0, %s42
    %s59 = sphi 0, %s43
    %s65 = sphi 0, %s67
    %s68 = sphi 0, %s65
    %s69 = sphi 0, %s68
    %s85 = sphi 0, %s69
    %s91 = sphi 0, %s93
    %s94 = sphi 0, %s91
    %s95 = sphi 0, %s94
    %s111 = sphi 0, %s95
    %s117 = sphi 0, %s119
    %s120 = sphi 0, %s117
    %s121 = sphi 0, %s120
    %s137 = sphi 0, %s121
    %s143 = sphi 0, %s145
    %s146 = sphi 0, %s143
    %s147 = sphi 0, %s146
    %s163 = sphi 0, %s147
  $region4: #{_observe_impl.1} parent=0 // loop_header_branch
    %14 = sbr.rel (%p12) target = $region8
  $region5: #{_observe_impl.1} parent=0 // loop_body
    %s16 = ssub.s32 %s11, 1
    %s17 = ssub.s32 %s11, 2
    %s24 = sadd.s32 1, %s19
    %p25 = scmp.ge.s32.totalorder %s24, 1
    %s26 = scalar_select %p25, 0, %s24
    %s27 = sadd.s32 1, %s18
    %s28 = scalar_select %p25, %s27, %s18
    %p29 = scmp.ge.s32.totalorder %s28, 2
    %s30 = scalar_select %p29, 0, %s28
    %s31 = sadd.s32 %s18, %s19
    %p32 = scmp.lt.s32.totalorder %s31, 0
    %s33 = scalar_select %p32, %s31, 0
    %s34 = sadd.s32 %s30, %s26
    %p35 = scmp.lt.s32.totalorder %s34, 0
    %s36 = scalar_select %p35, %s34, 0
    %s37 = ssub.s32 %s33, %s36
    %p38 = scmp.eq.s32.totalorder %s37, 0
    %s40 = sadd.s32 %s39, 1
    %s41 = scalar_select %p38, %s39, %s40
    %p44 = pneg %p38
    %p45 = scmp.eq.s32.totalorder %s11, 1
    %p46 = por %p44, %p45
    %p47 = scmp.ne.s32.totalorder %s39, %s42
    %p48 = scmp.eq.s32.totalorder %s11, 0
    %p49 = por %p47, %p48
    %p50 = scmp.ne.s32.totalorder %s39, %s42
    %p51 = scmp.eq.s32.totalorder %s16, 1
    %p52 = por %p50, %p51
    %p53 = scmp.ne.s32.totalorder %s42, %s43
    %p54 = scmp.eq.s32.totalorder %s16, 0
    %p55 = por %p53, %p54
    %p56 = scmp.ne.s32.totalorder %s42, %s43
    %p57 = scmp.eq.s32.totalorder %s17, 1
    %p58 = por %p56, %p57
    %p60 = scmp.ne.s32.totalorder %s43, %s59
    %p61 = scmp.eq.s32.totalorder %s17, 0
    %p62 = por %p60, %p61
    %s63 = ssub.s32 %s18, %s30
    %p64 = scmp.eq.s32.totalorder %s63, 0
    %s66 = sadd.s32 %s65, 1
    %s67 = scalar_select %p64, %s65, %s66
    %p70 = pneg %p64
    %p71 = scmp.eq.s32.totalorder %s11, 1
    %p72 = por %p70, %p71
    %p73 = scmp.ne.s32.totalorder %s65, %s68
    %p74 = scmp.eq.s32.totalorder %s11, 0
    %p75 = por %p73, %p74
    %p76 = scmp.ne.s32.totalorder %s65, %s68
    %p77 = scmp.eq.s32.totalorder %s16, 1
    %p78 = por %p76, %p77
    %p79 = scmp.ne.s32.totalorder %s68, %s69
    %p80 = scmp.eq.s32.totalorder %s16, 0
    %p81 = por %p79, %p80
    %p82 = scmp.ne.s32.totalorder %s68, %s69
    %p83 = scmp.eq.s32.totalorder %s17, 1
    %p84 = por %p82, %p83
    %p86 = scmp.ne.s32.totalorder %s69, %s85
    %p87 = scmp.eq.s32.totalorder %s17, 0
    %p88 = por %p86, %p87
    %s89 = ssub.s32 %s18, %s30
    %p90 = scmp.eq.s32.totalorder %s89, 0
    %s92 = sadd.s32 %s91, 1
    %s93 = scalar_select %p90, %s91, %s92
    %p96 = pneg %p90
    %p97 = scmp.eq.s32.totalorder %s11, 1
    %p98 = por %p96, %p97
    %p99 = scmp.ne.s32.totalorder %s91, %s94
    %p100 = scmp.eq.s32.totalorder %s11, 0
    %p101 = por %p99, %p100
    %p102 = scmp.ne.s32.totalorder %s91, %s94
    %p103 = scmp.eq.s32.totalorder %s16, 1
    %p104 = por %p102, %p103
    %p105 = scmp.ne.s32.totalorder %s94, %s95
    %p106 = scmp.eq.s32.totalorder %s16, 0
    %p107 = por %p105, %p106
    %p108 = scmp.ne.s32.totalorder %s94, %s95
    %p109 = scmp.eq.s32.totalorder %s17, 1
    %p110 = por %p108, %p109
    %p112 = scmp.ne.s32.totalorder %s95, %s111
    %p113 = scmp.eq.s32.totalorder %s17, 0
    %p114 = por %p112, %p113
    %s115 = ssub.s32 %s18, %s30
    %p116 = scmp.eq.s32.totalorder %s115, 0
    %s118 = sadd.s32 %s117, 1
    %s119 = scalar_select %p116, %s117, %s118
    %p122 = pneg %p116
    %p123 = scmp.eq.s32.totalorder %s11, 1
    %p124 = por %p122, %p123
    %p125 = scmp.ne.s32.totalorder %s117, %s120
    %p126 = scmp.eq.s32.totalorder %s11, 0
    %p127 = por %p125, %p126
    %p128 = scmp.ne.s32.totalorder %s117, %s120
    %p129 = scmp.eq.s32.totalorder %s16, 1
    %p130 = por %p128, %p129
    %p131 = scmp.ne.s32.totalorder %s120, %s121
    %p132 = scmp.eq.s32.totalorder %s16, 0
    %p133 = por %p131, %p132
    %p134 = scmp.ne.s32.totalorder %s120, %s121
    %p135 = scmp.eq.s32.totalorder %s17, 1
    %p136 = por %p134, %p135
    %p138 = scmp.ne.s32.totalorder %s121, %s137
    %p139 = scmp.eq.s32.totalorder %s17, 0
    %p140 = por %p138, %p139
    %s141 = ssub.s32 %s18, %s30
    %p142 = scmp.eq.s32.totalorder %s141, 0
    %s144 = sadd.s32 %s143, 1
    %s145 = scalar_select %p142, %s143, %s144
    %p148 = pneg %p142
    %p149 = scmp.eq.s32.totalorder %s11, 1
    %p150 = por %p148, %p149
    %p151 = scmp.ne.s32.totalorder %s143, %s146
    %p152 = scmp.eq.s32.totalorder %s11, 0
    %p153 = por %p151, %p152
    %p154 = scmp.ne.s32.totalorder %s143, %s146
    %p155 = scmp.eq.s32.totalorder %s16, 1
    %p156 = por %p154, %p155
    %p157 = scmp.ne.s32.totalorder %s146, %s147
    %p158 = scmp.eq.s32.totalorder %s16, 0
    %p159 = por %p157, %p158
    %p160 = scmp.ne.s32.totalorder %s146, %s147
    %p161 = scmp.eq.s32.totalorder %s17, 1
    %p162 = por %p160, %p161
    %p164 = scmp.ne.s32.totalorder %s147, %s163
    %p165 = scmp.eq.s32.totalorder %s17, 0
    %p166 = por %p164, %p165
    %p167 = scmp.le.s32.totalorder 1, %s11
    %p168 = scmp.lt.s32.totalorder %s11, 3
    %p169 = pnand %p167, %p168
    %p170 = pneg %p169
    // Predicated region
    $region9: #{_observe_impl.1} parent=5 // pred_check
      _
    $region10: #{_observe_impl.1} parent=5 // pred_check_branch
      %172 = sbr.rel (%p169) target = $region12
    $region11: #{_observe_impl.1} parent=5 // pred_region
      %s173 = ssub.s32 %s11, 1
    $region12: #{_observe_impl.1} parent=5 // pred_fallthru
      _
    %p174 = scmp.lt.s32.totalorder %s11, 2
    // Predicated region
    $region13: #{_observe_impl.1} parent=5 // pred_check
      %p175 = pneg %p174
    $region14: #{_observe_impl.1} parent=5 // pred_check_branch
      %177 = sbr.rel (%p175) target = $region16
    $region15: #{_observe_impl.1} parent=5 // pred_region
      // Predicated region
      $region17: #{_observe_impl.1} parent=15 // pred_check
        %p178 = pneg %p49
      $region18: #{_observe_impl.1} parent=15 // pred_check_branch
        %180 = sbr.rel (%p178) target = $region20
      $region19: #{_observe_impl.1} parent=15 // pred_region
        %s181 = sadd.s32 %s18, %s19
        %p182 = scmp.lt.s32.totalorder %s181, 0
        %s183 = scalar_select %p182, %s181, 0
        %s184 = smul.u32 2, %s183
        %p185 = scmp.lt.s32.totalorder %s184, 1
        %s186 = scalar_select %p185, %s184, 1
        %s187 = smul.addr %s186, 8
        %s188 = scalar_lea.vmem %s0, %s187
        %s189 = sadd.s32 %s18, %s19
        %p190 = scmp.lt.s32.totalorder %s189, 0
        %s191 = scalar_select %p190, %s189, 0
        %s192 = smul.u32 2, %s191
      $region20: #{_observe_impl.1} parent=15 // pred_fallthru
        _
    $region16: #{_observe_impl.1} parent=5 // pred_fallthru
      _
    %p193 = scmp.le.s32.totalorder 1, %s11
    %p194 = scmp.lt.s32.totalorder %s11, 3
    %p195 = pnand %p193, %p194
    %p196 = pneg %p195
    // Predicated region
    $region21: #{_observe_impl.1} parent=5 // pred_check
      _
    $region22: #{_observe_impl.1} parent=5 // pred_check_branch
      %198 = sbr.rel (%p195) target = $region24
    $region23: #{_observe_impl.1} parent=5 // pred_region
      %s199 = ssub.s32 %s11, 1
      %s200 = sadd.s32 %s20, %s21
      %p201 = scmp.lt.s32.totalorder %s200, 0
      %s202 = scalar_select %p201, %s200, 0
      %s203 = smul.u32 2, %s202
      %p204 = scmp.lt.s32.totalorder %s203, 1
      %s205 = scalar_select %p204, %s203, 1
      %s206 = smul.addr %s205, 8
      %s207 = scalar_lea.vmem %s0, %s206
      %p208 = pneg %p55
      %p209 = pneg %p52
      %p210 = pneg %p81
      %p211 = pneg %p78
      %p212 = scmp.lt.s32.totalorder %s20, 1
      %s213 = scalar_select %p212, %s20, 1
      %s214 = smul.addr %s213, 8
      %s215 = scalar_lea.vmem %s1, %s214
      %p216 = pneg %p107
      %p217 = pneg %p104
      %p218 = scmp.lt.s32.totalorder %s20, 1
      %s219 = scalar_select %p218, %s20, 1
      %s220 = smul.addr %s219, 8
      %s221 = scalar_lea.vmem %s2, %s220
      %p222 = pneg %p133
      %p223 = pneg %p130
      %p224 = scmp.lt.s32.totalorder %s20, 1
      %s225 = scalar_select %p224, %s20, 1
      %s226 = smul.addr %s225, 8
      %s227 = scalar_lea.vmem %s3, %s226
      %p228 = pneg %p159
      %p229 = pneg %p156
      %p230 = scmp.lt.s32.totalorder %s20, 1
      %s231 = scalar_select %p230, %s20, 1
      %s232 = smul.addr %s231, 8
      %s233 = scalar_lea.vmem %s4, %s232
      %s234 = sadd.s32 %s20, %s21
      %p235 = scmp.lt.s32.totalorder %s234, 0
      %s236 = scalar_select %p235, %s234, 0
      %s237 = smul.u32 2, %s236
      %p238 = scmp.lt.s32.totalorder %s237, 1
      %s239 = scalar_select %p238, %s237, 1
      %s240 = smul.addr %s239, 8
      %s241 = scalar_lea.vmem %s0, %s240
      %s242 = sadd.s32 %s20, %s21
      %p243 = scmp.lt.s32.totalorder %s242, 0
      %s244 = scalar_select %p243, %s242, 0
      %s245 = smul.u32 2, %s244
      %p246 = scmp.lt.s32.totalorder %s20, 1
      %s247 = scalar_select %p246, %s20, 1
      %s248 = smul.addr %s247, 8
      %s249 = scalar_lea.vmem %s1, %s248
      %p250 = scmp.lt.s32.totalorder %s20, 1
      %s251 = scalar_select %p250, %s20, 1
      %s252 = smul.addr %s251, 8
      %s253 = scalar_lea.vmem %s2, %s252
      %p254 = scmp.lt.s32.totalorder %s20, 1
      %s255 = scalar_select %p254, %s20, 1
      %s256 = smul.addr %s255, 8
      %s257 = scalar_lea.vmem %s3, %s256
      %p258 = scmp.lt.s32.totalorder %s20, 1
      %s259 = scalar_select %p258, %s20, 1
      %s260 = smul.addr %s259, 8
      %s261 = scalar_lea.vmem %s4, %s260
      %s262 = sadd.s32 %s20, %s21
      %p263 = scmp.eq.s32.totalorder %s21, 0
      // Predicated region
      $region25: #{_observe_impl.1} parent=23 // pred_check
        %p264 = pneg %p263
      $region26: #{_observe_impl.1} parent=23 // pred_check_branch
        %266 = sbr.rel (%p264) target = $region28
      $region27: #{_observe_impl.1} parent=23 // pred_region
        %267 = vst [vmem:[%s249] sm:$0xff] inf
        %268 = vst [vmem:[%s253] sm:$0xff] -inf
        %269 = vst [vmem:[%s257] sm:$0xff] 0.0
        %270 = vst [vmem:[%s261] sm:$0xff] 0.0
      $region28: #{_observe_impl.1} parent=23 // pred_fallthru
        _
      %v271 = vld [vmem:[%s241] sm:$0xff]
      %v272 = vld [vmem:[%s241 + $0x8] sm:$0xff]
      %p273 = scmp.lt.s32.totalorder %s262, 1
      // Predicated region
      $region29: #{_observe_impl.1} parent=23 // pred_check
        %p274 = pneg %p273
      $region30: #{_observe_impl.1} parent=23 // pred_check_branch
        %276 = sbr.rel (%p274) target = $region32
      $region31: #{_observe_impl.1} parent=23 // pred_region
        %v277 = vld [vmem:[%s249] sm:$0xff]
        %v278 = vmin.f32 %v271, %v272
        %v279 = vmin.f32 %v277, %v278
        %280 = vst [vmem:[%s249] sm:$0xff] %v279
        %v281 = vld [vmem:[%s253] sm:$0xff]
        %v282 = vmax.f32 %v271, %v272
        %v283 = vmax.f32 %v281, %v282
        %284 = vst [vmem:[%s253] sm:$0xff] %v283
        %v285 = vld [vmem:[%s257] sm:$0xff]
        %v286 = vadd.f32 %v271, %v272
        %v287 = vadd.f32 %v285, %v286
        %288 = vst [vmem:[%s257] sm:$0xff] %v287
        %v289 = vld [vmem:[%s261] sm:$0xff]
        %v290 = vmul.f32 %v271, %v271
        %v291 = vmul.f32 %v272, %v272
        %v292 = vadd.f32 %v290, %v291
        %v293 = vadd.f32 %v289, %v292
        %294 = vst [vmem:[%s261] sm:$0xff] %v293
      $region32: #{_observe_impl.1} parent=23 // pred_fallthru
        _
      %p295 = scmp.lt.s32.totalorder %s20, 1
      %s296 = scalar_select %p295, %s20, 1
      %s297 = smul.addr %s296, 8
      %s298 = scalar_lea.vmem %s1, %s297
      %p299 = scmp.lt.s32.totalorder %s20, 1
      %s300 = scalar_select %p299, %s20, 1
      %s301 = smul.addr %s300, 8
      %s302 = scalar_lea.vmem %s2, %s301
      %p303 = scmp.lt.s32.totalorder %s20, 1
      %s304 = scalar_select %p303, %s20, 1
      %s305 = smul.addr %s304, 8
      %s306 = scalar_lea.vmem %s3, %s305
      %p307 = scmp.lt.s32.totalorder %s20, 1
      %s308 = scalar_select %p307, %s20, 1
      %s309 = smul.addr %s308, 8
      %s310 = scalar_lea.vmem %s4, %s309
      // Predicated region
      $region33: #{_observe_impl.1} parent=23 // pred_check
        %p311 = pneg %p78
      $region34: #{_observe_impl.1} parent=23 // pred_check_branch
        %313 = sbr.rel (%p311) target = $region36
      $region35: #{_observe_impl.1} parent=23 // pred_region
        _
      $region36: #{_observe_impl.1} parent=23 // pred_fallthru
        _
      // Predicated region
      $region37: #{_observe_impl.1} parent=23 // pred_check
        %p314 = pneg %p104
      $region38: #{_observe_impl.1} parent=23 // pred_check_branch
        %316 = sbr.rel (%p314) target = $region40
      $region39: #{_observe_impl.1} parent=23 // pred_region
        _
      $region40: #{_observe_impl.1} parent=23 // pred_fallthru
        _
      // Predicated region
      $region41: #{_observe_impl.1} parent=23 // pred_check
        %p317 = pneg %p130
      $region42: #{_observe_impl.1} parent=23 // pred_check_branch
        %319 = sbr.rel (%p317) target = $region44
      $region43: #{_observe_impl.1} parent=23 // pred_region
        _
      $region44: #{_observe_impl.1} parent=23 // pred_fallthru
        _
      // Predicated region
      $region45: #{_observe_impl.1} parent=23 // pred_check
        %p320 = pneg %p156
      $region46: #{_observe_impl.1} parent=23 // pred_check_branch
        %322 = sbr.rel (%p320) target = $region48
      $region47: #{_observe_impl.1} parent=23 // pred_region
        _
      $region48: #{_observe_impl.1} parent=23 // pred_fallthru
        _
    $region24: #{_observe_impl.1} parent=5 // pred_fallthru
      _
    %p323 = scmp.le.s32.totalorder 2, %s11
    // Predicated region
    $region49: #{_observe_impl.1} parent=5 // pred_check
      %p324 = pneg %p323
    $region50: #{_observe_impl.1} parent=5 // pred_check_branch
      %326 = sbr.rel (%p324) target = $region52
    $region51: #{_observe_impl.1} parent=5 // pred_region
      %s327 = ssub.s32 %s11, 2
      // Predicated region
      $region53: #{_observe_impl.1} parent=51 // pred_check
        %p328 = pneg %p84
      $region54: #{_observe_impl.1} parent=51 // pred_check_branch
        %330 = sbr.rel (%p328) target = $region56
      $region55: #{_observe_impl.1} parent=51 // pred_region
        %p331 = scmp.lt.s32.totalorder %s22, 1
        %s332 = scalar_select %p331, %s22, 1
        %s333 = smul.addr %s332, 8
        %s334 = scalar_lea.vmem %s1, %s333
      $region56: #{_observe_impl.1} parent=51 // pred_fallthru
        _
      // Predicated region
      $region57: #{_observe_impl.1} parent=51 // pred_check
        %p335 = pneg %p110
      $region58: #{_observe_impl.1} parent=51 // pred_check_branch
        %337 = sbr.rel (%p335) target = $region60
      $region59: #{_observe_impl.1} parent=51 // pred_region
        %p338 = scmp.lt.s32.totalorder %s22, 1
        %s339 = scalar_select %p338, %s22, 1
        %s340 = smul.addr %s339, 8
        %s341 = scalar_lea.vmem %s2, %s340
      $region60: #{_observe_impl.1} parent=51 // pred_fallthru
        _
      // Predicated region
      $region61: #{_observe_impl.1} parent=51 // pred_check
        %p342 = pneg %p136
      $region62: #{_observe_impl.1} parent=51 // pred_check_branch
        %344 = sbr.rel (%p342) target = $region64
      $region63: #{_observe_impl.1} parent=51 // pred_region
        %p345 = scmp.lt.s32.totalorder %s22, 1
        %s346 = scalar_select %p345, %s22, 1
        %s347 = smul.addr %s346, 8
        %s348 = scalar_lea.vmem %s3, %s347
      $region64: #{_observe_impl.1} parent=51 // pred_fallthru
        _
      // Predicated region
      $region65: #{_observe_impl.1} parent=51 // pred_check
        %p349 = pneg %p162
      $region66: #{_observe_impl.1} parent=51 // pred_check_branch
        %351 = sbr.rel (%p349) target = $region68
      $region67: #{_observe_impl.1} parent=51 // pred_region
        %p352 = scmp.lt.s32.totalorder %s22, 1
        %s353 = scalar_select %p352, %s22, 1
        %s354 = smul.addr %s353, 8
        %s355 = scalar_lea.vmem %s4, %s354
      $region68: #{_observe_impl.1} parent=51 // pred_fallthru
        _
    $region52: #{_observe_impl.1} parent=5 // pred_fallthru
      _
  $region6: #{_observe_impl.1} parent=0 // loop_footer
    %s15 = sadd.s32 1, %s11
  $region7: #{_observe_impl.1} parent=0 // loop_footer_branch
    %10 = sbr.rel target = $region3
  $region8: #{_observe_impl.1} parent=0 // loop_exit
    _

</llo_original>
